<compile_context>
chip_gen: v7x
topology: tpu7x:2x2x1
jax: 0.10.0
libtpu: 0.0.40
codegen_flags: <defaults>
</compile_context>

<pallas_src>
import math

import jax
import jax.numpy as jnp
from jax import lax
from jax.experimental import pallas as pl
from jax.experimental.pallas import tpu as pltpu


def self_attention_v1_kernel(x_ref, wqkv_ref, o_ref):
    d_out = o_ref.shape[-1]

    x = x_ref[...]          # (B, S, d_in) f32
    w_qkv = wqkv_ref[...]   # (d_in, 3*d_out); query columns pre-scaled by 1/sqrt(d_out)

    # Fused projection: one MXU contraction over all B*S rows (weights shared
    # across the batch, no batch dims on the contraction).
    qkv = lax.dot_general(
        x, w_qkv,
        dimension_numbers=(((2,), (0,)), ((), ())),
        preferred_element_type=jnp.float32,
    )                                                    # (B, S, 3*d_out)
    # TODO(synk): for real d_out, pad these splits to 128-aligned lane offsets
    # so they stay zero-cost views instead of cross-lane selects.
    q = qkv[..., :d_out]                  # scale already folded into the weights
    k = qkv[..., d_out:2 * d_out]
    v = qkv[..., 2 * d_out:3 * d_out]

    # Batched attention scores: contract last axes of Q and K (no K transpose).
    attn_scores = jnp.einsum('bqd,bkd->bqk', q, k,
                             preferred_element_type=jnp.float32)   # (B, S, S)

    # Softmax over the last axis (matches torch.softmax(..., dim=-1)), f32.
    m = jnp.max(attn_scores, axis=-1, keepdims=True)
    p = jnp.exp(attn_scores - m)
    denom = jnp.sum(p, axis=-1, keepdims=True)
    # Exact reciprocal + multiply to hold the 1e-5 tolerance; switch to
    # approx=True (EUP vrcp slot) in the realistic-size flash version.
    attn_weights = p * pl.reciprocal(denom, approx=False)

    # Context vectors: attn_weights @ V -> (B, S, d_out)
    context = jnp.einsum('bqk,bkd->bqd', attn_weights, v,
                         preferred_element_type=jnp.float32)
    o_ref[...] = context.astype(o_ref.dtype)


def prepare_qkv_weights(w_query, w_key, w_value):
    """One-time weight prep (hoisted out of the per-call path).

    Concatenates W_query|W_key|W_value into a single (d_in, 3*d_out) operand and
    folds the 1/sqrt(d_out) attention scale into the query columns, so the
    kernel needs neither a per-call concat nor an in-kernel activation scale.
    """
    d_out = w_query.shape[1]
    scale = 1.0 / math.sqrt(d_out)
    return jnp.concatenate([w_query * scale, w_key, w_value], axis=1)


def self_attention_v1_batched(x_batched, w_qkv):
    """x_batched: (B, S, d_in); w_qkv from prepare_qkv_weights. Returns (B, S, d_out)."""
    b, seq, _ = x_batched.shape
    d_out = w_qkv.shape[1] // 3
    return pl.pallas_call(
        self_attention_v1_kernel,
        out_shape=jax.ShapeDtypeStruct((b, seq, d_out), x_batched.dtype),
        # No grid: the whole batch is a single VMEM block (shapes are tiny),
        # so launch/DMA overhead is paid once for all B sequences.
        in_specs=[
            pl.BlockSpec(memory_space=pltpu.MemorySpace.VMEM),
            pl.BlockSpec(memory_space=pltpu.MemorySpace.VMEM),
        ],
        out_specs=pl.BlockSpec(memory_space=pltpu.MemorySpace.VMEM),
    )(x_batched, w_qkv)


def self_attention_v1_ref(x, w_query, w_key, w_value):
    queries = x @ w_query
    keys = x @ w_key
    values = x @ w_value
    scores = queries @ keys.T
    weights = jax.nn.softmax(scores / math.sqrt(keys.shape[-1]), axis=-1)
    return weights @ values


if __name__ == "__main__":
    # Shapes from chap03.py: inputs is (6, 3), stacked into a batch of 2; d_out = 2.
    inputs = jnp.array(
        [[0.43, 0.15, 0.89],
         [0.55, 0.87, 0.66],
         [0.57, 0.85, 0.64],
         [0.22, 0.58, 0.33],
         [0.77, 0.25, 0.10],
         [0.05, 0.80, 0.55]], dtype=jnp.float32)
    x_batched = jnp.stack([inputs, inputs], axis=0)      # (2, 6, 3)

    seq, d_in = inputs.shape
    d_out = 2

    # Parameters: torch.rand(d_in, d_out) analog -> uniform [0, 1), deterministic.
    kq, kk, kv = jax.random.split(jax.random.PRNGKey(0), 3)
    w_query = jax.random.uniform(kq, (d_in, d_out), dtype=jnp.float32)
    w_key = jax.random.uniform(kk, (d_in, d_out), dtype=jnp.float32)
    w_value = jax.random.uniform(kv, (d_in, d_out), dtype=jnp.float32)

    # Weight prep once (concat + scale fold), outside the per-call path.
    w_qkv = jax.block_until_ready(prepare_qkv_weights(w_query, w_key, w_value))

    out = self_attention_v1_batched(x_batched, w_qkv)
    out = jax.block_until_ready(out)

    ref = jnp.stack(
        [self_attention_v1_ref(x_batched[i], w_query, w_key, w_value)
         for i in range(x_batched.shape[0])], axis=0)

    assert out.shape == (2, seq, d_out), out.shape
    assert jnp.allclose(out, ref, atol=1e-5, rtol=1e-5), (out, ref)

    print("KERNEL_OK")
</pallas_src>

<mosaic_0001>
module attributes {stable_mosaic.version = 11 : i64} {
  func.func @self_attention_v1_kernel(%arg0: memref<2x6x3xf32, #tpu.memory_space<vmem>>, %arg1: memref<3x6xf32, #tpu.memory_space<vmem>>, %arg2: memref<2x6x2xf32, #tpu.memory_space<vmem>>) attributes {dimension_semantics = [], scalar_prefetch = 0 : i64, scratch_operands = 0 : i64, tpu.core_type = #tpu.core_type<tc>} {
    %c0 = arith.constant 0 : index
    %c0_0 = arith.constant 0 : index
    %c0_1 = arith.constant 0 : index
    %0 = vector.load %arg0[%c0, %c0_0, %c0_1] : memref<2x6x3xf32, #tpu.memory_space<vmem>>, vector<2x6x3xf32>
    %c0_2 = arith.constant 0 : index
    %c0_3 = arith.constant 0 : index
    %1 = vector.load %arg1[%c0_2, %c0_3] : memref<3x6xf32, #tpu.memory_space<vmem>>, vector<3x6xf32>
    %cst = arith.constant dense<0.000000e+00> : vector<2x6x6xf32>
    %2 = tpu.matmul %0, %1, %cst {dimension_numbers = #tpu.dot_dimension_numbers<[2], [0], [0, 1], [1], [0, 0, 0, 1, 1, 1], [], []>} : vector<2x6x3xf32>, vector<3x6xf32>, vector<2x6x6xf32> -> vector<2x6x6xf32>
    %3 = vector.extract_strided_slice %2 {offsets = [0, 0, 0], sizes = [2, 6, 2], strides = [1, 1, 1]} : vector<2x6x6xf32> to vector<2x6x2xf32>
    %4 = vector.extract_strided_slice %2 {offsets = [0, 0, 2], sizes = [2, 6, 2], strides = [1, 1, 1]} : vector<2x6x6xf32> to vector<2x6x2xf32>
    %5 = vector.extract_strided_slice %2 {offsets = [0, 0, 4], sizes = [2, 6, 2], strides = [1, 1, 1]} : vector<2x6x6xf32> to vector<2x6x2xf32>
    "tpu.trace_start"() <{level = 10 : i32, message = "bqd,bkd->bqk"}> : () -> ()
    %cst_4 = arith.constant dense<0.000000e+00> : vector<2x6x6xf32>
    %6 = tpu.matmul %3, %4, %cst_4 {dimension_numbers = #tpu.dot_dimension_numbers<[2], [2], [1], [1], [0, 0, 0, 1, 1, 1], [0], [0]>} : vector<2x6x2xf32>, vector<2x6x2xf32>, vector<2x6x6xf32> -> vector<2x6x6xf32>
    "tpu.trace_stop"() : () -> ()
    %cst_5 = arith.constant dense<0xFF800000> : vector<2x6xf32>
    %7 = vector.multi_reduction <maximumf>, %6, %cst_5 [2] : vector<2x6x6xf32> to vector<2x6xf32>
    %8 = vector.shape_cast %7 : vector<2x6xf32> to vector<2x6x1xf32>
    %9 = vector.broadcast %8 : vector<2x6x1xf32> to vector<2x6x6xf32>
    %10 = arith.subf %6, %9 : vector<2x6x6xf32>
    %11 = math.exp %10 : vector<2x6x6xf32>
    %cst_6 = arith.constant dense<0.000000e+00> : vector<2x6xf32>
    %12 = vector.multi_reduction <add>, %11, %cst_6 [2] : vector<2x6x6xf32> to vector<2x6xf32>
    %13 = vector.shape_cast %12 : vector<2x6xf32> to vector<2x6x1xf32>
    %14 = tpu.reciprocal %13 : vector<2x6x1xf32> -> vector<2x6x1xf32>
    %15 = vector.broadcast %14 : vector<2x6x1xf32> to vector<2x6x6xf32>
    %16 = arith.mulf %11, %15 : vector<2x6x6xf32>
    "tpu.trace_start"() <{level = 10 : i32, message = "bqk,bkd->bqd"}> : () -> ()
    %cst_7 = arith.constant dense<0.000000e+00> : vector<2x6x2xf32>
    %17 = tpu.matmul %16, %5, %cst_7 {dimension_numbers = #tpu.dot_dimension_numbers<[2], [1], [1], [2], [0, 0, 0, 1, 1, 2], [0], [0]>} : vector<2x6x6xf32>, vector<2x6x2xf32>, vector<2x6x2xf32> -> vector<2x6x2xf32>
    "tpu.trace_stop"() : () -> ()
    %c0_8 = arith.constant 0 : index
    %c0_9 = arith.constant 0 : index
    %c0_10 = arith.constant 0 : index
    %18 = vector.load %arg2[%c0_8, %c0_9, %c0_10] : memref<2x6x2xf32, #tpu.memory_space<vmem>>, vector<2x6x2xf32>
    tpu.vector_store %arg2[%c0_8, %c0_9, %c0_10], %17 {strides = array<i32>} : memref<2x6x2xf32, #tpu.memory_space<vmem>>, vector<2x6x2xf32>,
    return
  }
}

</mosaic_0001>

<llo_original>
// kernel: tpu_custom_call.1
$region0: #{tpu_custom_call.1}
  #allocation0 [shape = 'u32[]', space=smem, size = 0x4, offset = 0x4, fixed_abs, tag = 'smem constant byte address 0x4 - core index']
  #allocation1 [shape = 'u32[144,128]{1,0:T(1,128)}', space=vmem, size = 0x12000, scoped, tag = 'internal scratch']
  %s0 = inlined_call_operand.vmem [shape: f32[2,6,3], index: 0, kind: input, shape index: {}]
  %s1 = inlined_call_operand.vmem [shape: f32[3,6], index: 1, kind: input, shape index: {}]
  %s2 = inlined_call_operand.vmem [shape: f32[2,6,2], index: 2, kind: output, shape index: {}]
  %s3 = sld [smem:[#allocation0]]
  $region18: #{tpu_custom_call.1} parent=0
    _
  %s5 = ssub.s32 1, %s3
  %s6 = scalar_select 0, %s5, %s3
  // Predicated region
  $region2: #{tpu_custom_call.1} parent=0 // pred_check
    _
  $region3: #{tpu_custom_call.1} parent=0 // pred_check_branch
    %8 = sbr.rel (0) target = $region5
  $region4: #{tpu_custom_call.1} parent=0 // pred_region
    _
  $region5: #{tpu_custom_call.1} parent=0 // pred_fallthru
    _
  // Predicated region
  $region6: #{tpu_custom_call.1} parent=0 // pred_check
    _
  $region7: #{tpu_custom_call.1} parent=0 // pred_check_branch
    %10 = sbr.rel (0) target = $region9
  $region8: #{tpu_custom_call.1} parent=0 // pred_region
    _
  $region9: #{tpu_custom_call.1} parent=0 // pred_fallthru
    _
  %v11 = vld [vmem:[%s0] sm:$0x3f]
  %v12 = vld [vmem:[%s0 + $0x8] sm:$0x3f]
  %v13 = vld [vmem:[%s1] sm:$0x7]
  %v16 = vcombine.high %v11, %v11
  %v18 = vunpack.c.l.s4 1983009808
  %v19 = vunpack.c.0.s8 %v18
  %v20 = vlaneseq
  %v21 = vshrl.u32 %v20, 7
  %v22 = vsub.s32 %v19, %v21
  %v23 = vrot.slane %v11, %v22
  %v25 = vunpack.c.l.s4 1983009808
  %v26 = vunpack.c.0.s8 %v25
  %v27 = vlaneseq
  %v28 = vshrl.u32 %v27, 7
  %v29 = vsub.s32 %v26, %v28
  %v30 = vrot.slane %v16, %v29
  %v31 = vcombine.high %v23, %v23
  %v32 = vcombine.high %v12, %v12
  %v34 = vunpack.c.l.s4 1983009808
  %v35 = vunpack.c.0.s8 %v34
  %v36 = vlaneseq
  %v37 = vshrl.u32 %v36, 7
  %v38 = vsub.s32 %v35, %v37
  %v39 = vrot.slane %v12, %v38
  %v41 = vunpack.c.l.s4 1983009808
  %v42 = vunpack.c.0.s8 %v41
  %v43 = vlaneseq
  %v44 = vshrl.u32 %v43, 7
  %v45 = vsub.s32 %v42, %v44
  %v46 = vrot.slane %v32, %v45
  %v47 = vcombine.high %v39, %v39
  %v48 = vcombine.low %v23, %v31
  %v49 = vcombine.low %v30, %v39
  %v51 = vunpack.c.l.s4 1983009808
  %v52 = vunpack.c.0.s8 %v51
  %v53 = vlaneseq
  %v54 = vshrl.u32 %v53, 7
  %v55 = vsub.s32 %v52, %v54
  %v56 = vrot.slane %v48, %v55
  %v58 = vunpack.c.l.s4 1983009808
  %v59 = vunpack.c.0.s8 %v58
  %v60 = vlaneseq
  %v61 = vshrl.u32 %v60, 7
  %v62 = vsub.s32 %v59, %v61
  %v63 = vrot.slane %v49, %v62
  %v64 = vcombine.low %v56, %v63
  %v65 = vcombine.low %v47, %v46
  %v67 = vunpack.c.l.s4 1983009808
  %v68 = vunpack.c.0.s8 %v67
  %v69 = vlaneseq
  %v70 = vshrl.u32 %v69, 7
  %v71 = vsub.s32 %v68, %v70
  %v72 = vrot.slane %v65, %v71
  %vm73 = vcmask 23552
  %v74 = vsel %vm73, %v64, 0
  %v76 = vsel %vm73, %v72, 0
  %vm78 = vcmask 1042432
  %v80 = vsel %vm78, %v13, 0
  %82 = vmatprep.subr.mxu0 0.0
  %83 = vmatpush1.msra.mxu0 %v80
  %84 = vmatprep.subr.mxu0 0.0
  %85 = vmatpush1.msra.mxu0 0.0
  %86 = vmatprep.subr.mxu0 0.0
  %87 = vmatpush1.msra.mxu0 0.0
  %88 = vmatprep.subr.mxu0 0.0
  %89 = vmatpush1.msra.mxu0 0.0
  %90 = vmatprep.subr.mxu0 0.0
  %91 = vmatpush1.msra.mxu0 0.0
  %92 = vmatprep.subr.mxu0 0.0
  %93 = vmatpush1.msra.mxu0 0.0
  %94 = vmatprep.subr.mxu0 0.0
  %95 = vmatpush1.msra.mxu0 0.0
  %96 = vmatprep.subr.mxu0 0.0
  %97 = vmatpush1.msra.mxu0 0.0
  %98 = vmatprep.subr.mxu0 0.0
  %99 = vmatpush1.msra.mxu0 0.0
  %100 = vmatprep.subr.mxu0 0.0
  %101 = vmatpush1.msra.mxu0 0.0
  %102 = vmatprep.subr.mxu0 0.0
  %103 = vmatpush1.msra.mxu0 0.0
  %104 = vmatprep.subr.mxu0 0.0
  %105 = vmatpush1.msra.mxu0 0.0
  %106 = vmatprep.subr.mxu0 0.0
  %107 = vmatpush1.msra.mxu0 0.0
  %108 = vmatprep.subr.mxu0 0.0
  %109 = vmatpush1.msra.mxu0 0.0
  %110 = vmatprep.subr.mxu0 0.0
  %111 = vmatpush1.msra.mxu0 0.0
  %112 = vmatprep.subr.mxu0 0.0
  %113 = vmatpush1.msra.mxu0 0.0
  %114 = vmatprep.subr.mxu0 0.0
  %115 = vmatpush1.msra.mxu0 0.0
  %116 = vmatprep.subr.mxu0 0.0
  %117 = vmatpush1.msra.mxu0 0.0
  %118 = vmatprep.subr.mxu0 0.0
  %119 = vmatpush1.msra.mxu0 0.0
  %120 = vmatprep.subr.mxu0 0.0
  %121 = vmatpush1.msra.mxu0 0.0
  %122 = vmatprep.subr.mxu0 0.0
  %123 = vmatpush1.msra.mxu0 0.0
  %124 = vmatprep.subr.mxu0 0.0
  %125 = vmatpush1.msra.mxu0 0.0
  %126 = vmatprep.subr.mxu0 0.0
  %127 = vmatpush1.msra.mxu0 0.0
  %128 = vmatprep.subr.mxu0 0.0
  %129 = vmatpush1.msra.mxu0 0.0
  %130 = vmatprep.subr.mxu0 0.0
  %131 = vmatpush1.msra.mxu0 0.0
  %132 = vmatprep.subr.mxu0 0.0
  %133 = vmatpush1.msra.mxu0 0.0
  %134 = vmatprep.subr.mxu0 0.0
  %135 = vmatpush1.msra.mxu0 0.0
  %136 = vmatprep.subr.mxu0 0.0
  %137 = vmatpush1.msra.mxu0 0.0
  %138 = vmatprep.subr.mxu0 0.0
  %139 = vmatpush1.msra.mxu0 0.0
  %140 = vmatprep.subr.mxu0 0.0
  %141 = vmatpush1.msra.mxu0 0.0
  %142 = vmatprep.subr.mxu0 0.0
  %143 = vmatpush1.msra.mxu0 0.0
  %144 = vmatprep.subr.mxu0 0.0
  %145 = vmatpush1.msra.mxu0 0.0
  %146 = vmatprep.mubr.f32.mxu0 0.0
  %147 = vmatmul.mubr.f32.gmra.mrb[0].mxu0 %v74
  %v148 = vpop.f32.mrb[0].mxu0
  %v149 = vadd.f32 0.0, %v148
  %v150 = vpop.f32.mrb[0].mxu0
  %151 = vmatprep.mubr.f32.mxu0 0.0
  %152 = vmatmul.mubr.f32.gmra.mrb[0].mxu0 %v76
  %v153 = vpop.f32.mrb[0].mxu0
  %v154 = vadd.f32 0.0, %v153
  %v155 = vpop.f32.mrb[0].mxu0
  %156 = vdwg.mxu0
  %v159 = vcombine.high %v149, %v149
  %v161 = vunpack.c.l.s4 1983009808
  %v162 = vunpack.c.0.s8 %v161
  %v163 = vlaneseq
  %v164 = vshrl.u32 %v163, 7
  %v165 = vsub.s32 %v162, %v164
  %v166 = vrot.slane %v149, %v165
  %v168 = vunpack.c.l.s4 1983009808
  %v169 = vunpack.c.0.s8 %v168
  %v170 = vlaneseq
  %v171 = vshrl.u32 %v170, 7
  %v172 = vsub.s32 %v169, %v171
  %v173 = vrot.slane %v159, %v172
  %v174 = vcombine.high %v166, %v166
  %v175 = vcombine.high %v173, %v173
  %v177 = vunpack.c.l.s4 1983009808
  %v178 = vunpack.c.0.s8 %v177
  %v179 = vlaneseq
  %v180 = vshrl.u32 %v179, 7
  %v181 = vsub.s32 %v178, %v180
  %v182 = vrot.slane %v154, %v181
  %v183 = vcombine.high %v182, %v182
  %v184 = vcombine.low %v166, %v174
  %v186 = vunpack.c.l.s4 1983009808
  %v187 = vunpack.c.0.s8 %v186
  %v188 = vlaneseq
  %v189 = vshrl.u32 %v188, 7
  %v190 = vsub.s32 %v187, %v189
  %v191 = vrot.slane %v184, %v190
  %v193 = vunpack.c.l.s4 1983009808
  %v194 = vunpack.c.0.s8 %v193
  %v195 = vlaneseq
  %v196 = vshrl.u32 %v195, 7
  %v197 = vsub.s32 %v194, %v196
  %v198 = vrot.slane %v173, %v197
  %v199 = vcombine.low %v191, %v198
  %200 = vrot.lane.b32.xlu0 %v199, 126
  %v201 = vpop.permute.xlu0 %200
  %vm202 = vcmask 15360
  %v203 = vsel %vm202, %v199, 0
  %v205 = vsel %vm202, %v201, 0
  %207 = vmatprep.subr.mxu0 0.0
  %208 = vmatpush1.xpose.msra.mxu0 %v205
  %209 = vmatprep.subr.mxu0 0.0
  %210 = vmatpush1.xpose.msra.mxu0 0.0
  %211 = vmatprep.subr.mxu0 0.0
  %212 = vmatpush1.xpose.msra.mxu0 0.0
  %213 = vmatprep.subr.mxu0 0.0
  %214 = vmatpush1.xpose.msra.mxu0 0.0
  %215 = vmatprep.subr.mxu0 0.0
  %216 = vmatpush1.xpose.msra.mxu0 0.0
  %217 = vmatprep.subr.mxu0 0.0
  %218 = vmatpush1.xpose.msra.mxu0 0.0
  %219 = vmatprep.subr.mxu0 0.0
  %220 = vmatpush1.xpose.msra.mxu0 0.0
  %221 = vmatprep.subr.mxu0 0.0
  %222 = vmatpush1.xpose.msra.mxu0 0.0
  %223 = vmatprep.subr.mxu0 0.0
  %224 = vmatpush1.xpose.msra.mxu0 0.0
  %225 = vmatprep.subr.mxu0 0.0
  %226 = vmatpush1.xpose.msra.mxu0 0.0
  %227 = vmatprep.subr.mxu0 0.0
  %228 = vmatpush1.xpose.msra.mxu0 0.0
  %229 = vmatprep.subr.mxu0 0.0
  %230 = vmatpush1.xpose.msra.mxu0 0.0
  %231 = vmatprep.subr.mxu0 0.0
  %232 = vmatpush1.xpose.msra.mxu0 0.0
  %233 = vmatprep.subr.mxu0 0.0
  %234 = vmatpush1.xpose.msra.mxu0 0.0
  %235 = vmatprep.subr.mxu0 0.0
  %236 = vmatpush1.xpose.msra.mxu0 0.0
  %237 = vmatprep.subr.mxu0 0.0
  %238 = vmatpush1.xpose.msra.mxu0 0.0
  %239 = vmatprep.subr.mxu0 0.0
  %240 = vmatpush1.xpose.msra.mxu0 0.0
  %241 = vmatprep.subr.mxu0 0.0
  %242 = vmatpush1.xpose.msra.mxu0 0.0
  %243 = vmatprep.subr.mxu0 0.0
  %244 = vmatpush1.xpose.msra.mxu0 0.0
  %245 = vmatprep.subr.mxu0 0.0
  %246 = vmatpush1.xpose.msra.mxu0 0.0
  %247 = vmatprep.subr.mxu0 0.0
  %248 = vmatpush1.xpose.msra.mxu0 0.0
  %249 = vmatprep.subr.mxu0 0.0
  %250 = vmatpush1.xpose.msra.mxu0 0.0
  %251 = vmatprep.subr.mxu0 0.0
  %252 = vmatpush1.xpose.msra.mxu0 0.0
  %253 = vmatprep.subr.mxu0 0.0
  %254 = vmatpush1.xpose.msra.mxu0 0.0
  %255 = vmatprep.subr.mxu0 0.0
  %256 = vmatpush1.xpose.msra.mxu0 0.0
  %257 = vmatprep.subr.mxu0 0.0
  %258 = vmatpush1.xpose.msra.mxu0 0.0
  %259 = vmatprep.subr.mxu0 0.0
  %260 = vmatpush1.xpose.msra.mxu0 0.0
  %261 = vmatprep.subr.mxu0 0.0
  %262 = vmatpush1.xpose.msra.mxu0 0.0
  %263 = vmatprep.subr.mxu0 0.0
  %264 = vmatpush1.xpose.msra.mxu0 0.0
  %265 = vmatprep.subr.mxu0 0.0
  %266 = vmatpush1.xpose.msra.mxu0 0.0
  %267 = vmatprep.subr.mxu0 0.0
  %268 = vmatpush1.xpose.msra.mxu0 0.0
  %269 = vmatprep.subr.mxu0 0.0
  %270 = vmatpush1.xpose.msra.mxu0 0.0
  %271 = vmatprep.mubr.f32.mxu0 0.0
  %272 = vmatmul.mubr.f32.gmra.mrb[0].mxu0 %v203
  %v273 = vpop.f32.mrb[0].mxu0
  %v274 = vadd.f32 0.0, %v273
  %v275 = vpop.f32.mrb[0].mxu0
  %276 = vdwg.mxu0
  %v277 = vcombine.low %v175, %v182
  %v279 = vunpack.c.l.s4 1983009808
  %v280 = vunpack.c.0.s8 %v279
  %v281 = vlaneseq
  %v282 = vshrl.u32 %v281, 7
  %v283 = vsub.s32 %v280, %v282
  %v284 = vrot.slane %v277, %v283
  %v286 = vunpack.c.l.s4 1983009808
  %v287 = vunpack.c.0.s8 %v286
  %v288 = vlaneseq
  %v289 = vshrl.u32 %v288, 7
  %v290 = vsub.s32 %v287, %v289
  %v291 = vrot.slane %v183, %v290
  %v292 = vcombine.low %v284, %v291
  %293 = vrot.lane.b32.xlu0 %v292, 126
  %v294 = vpop.permute.xlu0 %293
  %v295 = vsel %vm202, %v292, 0
  %v297 = vsel %vm202, %v294, 0
  %299 = vmatprep.subr.mxu0 0.0
  %300 = vmatpush1.xpose.msra.mxu0 %v297
  %301 = vmatprep.subr.mxu0 0.0
  %302 = vmatpush1.xpose.msra.mxu0 0.0
  %303 = vmatprep.subr.mxu0 0.0
  %304 = vmatpush1.xpose.msra.mxu0 0.0
  %305 = vmatprep.subr.mxu0 0.0
  %306 = vmatpush1.xpose.msra.mxu0 0.0
  %307 = vmatprep.subr.mxu0 0.0
  %308 = vmatpush1.xpose.msra.mxu0 0.0
  %309 = vmatprep.subr.mxu0 0.0
  %310 = vmatpush1.xpose.msra.mxu0 0.0
  %311 = vmatprep.subr.mxu0 0.0
  %312 = vmatpush1.xpose.msra.mxu0 0.0
  %313 = vmatprep.subr.mxu0 0.0
  %314 = vmatpush1.xpose.msra.mxu0 0.0
  %315 = vmatprep.subr.mxu0 0.0
  %316 = vmatpush1.xpose.msra.mxu0 0.0
  %317 = vmatprep.subr.mxu0 0.0
  %318 = vmatpush1.xpose.msra.mxu0 0.0
  %319 = vmatprep.subr.mxu0 0.0
  %320 = vmatpush1.xpose.msra.mxu0 0.0
  %321 = vmatprep.subr.mxu0 0.0
  %322 = vmatpush1.xpose.msra.mxu0 0.0
  %323 = vmatprep.subr.mxu0 0.0
  %324 = vmatpush1.xpose.msra.mxu0 0.0
  %325 = vmatprep.subr.mxu0 0.0
  %326 = vmatpush1.xpose.msra.mxu0 0.0
  %327 = vmatprep.subr.mxu0 0.0
  %328 = vmatpush1.xpose.msra.mxu0 0.0
  %329 = vmatprep.subr.mxu0 0.0
  %330 = vmatpush1.xpose.msra.mxu0 0.0
  %331 = vmatprep.subr.mxu0 0.0
  %332 = vmatpush1.xpose.msra.mxu0 0.0
  %333 = vmatprep.subr.mxu0 0.0
  %334 = vmatpush1.xpose.msra.mxu0 0.0
  %335 = vmatprep.subr.mxu0 0.0
  %336 = vmatpush1.xpose.msra.mxu0 0.0
  %337 = vmatprep.subr.mxu0 0.0
  %338 = vmatpush1.xpose.msra.mxu0 0.0
  %339 = vmatprep.subr.mxu0 0.0
  %340 = vmatpush1.xpose.msra.mxu0 0.0
  %341 = vmatprep.subr.mxu0 0.0
  %342 = vmatpush1.xpose.msra.mxu0 0.0
  %343 = vmatprep.subr.mxu0 0.0
  %344 = vmatpush1.xpose.msra.mxu0 0.0
  %345 = vmatprep.subr.mxu0 0.0
  %346 = vmatpush1.xpose.msra.mxu0 0.0
  %347 = vmatprep.subr.mxu0 0.0
  %348 = vmatpush1.xpose.msra.mxu0 0.0
  %349 = vmatprep.subr.mxu0 0.0
  %350 = vmatpush1.xpose.msra.mxu0 0.0
  %351 = vmatprep.subr.mxu0 0.0
  %352 = vmatpush1.xpose.msra.mxu0 0.0
  %353 = vmatprep.subr.mxu0 0.0
  %354 = vmatpush1.xpose.msra.mxu0 0.0
  %355 = vmatprep.subr.mxu0 0.0
  %356 = vmatpush1.xpose.msra.mxu0 0.0
  %357 = vmatprep.subr.mxu0 0.0
  %358 = vmatpush1.xpose.msra.mxu0 0.0
  %359 = vmatprep.subr.mxu0 0.0
  %360 = vmatpush1.xpose.msra.mxu0 0.0
  %361 = vmatprep.subr.mxu0 0.0
  %362 = vmatpush1.xpose.msra.mxu0 0.0
  %363 = vmatprep.mubr.f32.mxu0 0.0
  %364 = vmatmul.mubr.f32.gmra.mrb[0].mxu0 %v295
  %v365 = vpop.f32.mrb[0].mxu0
  %v366 = vadd.f32 0.0, %v365
  %v367 = vpop.f32.mrb[0].mxu0
  %368 = vdwg.mxu0
  %vm369 = vcmask 46080
  %v370 = vsel %vm369, %v274, -inf
  %371 = vmax.xlane.f32.xlu0 %v370
  %v372 = vpop.xlane.xlu0 %371
  %v373 = vsel %vm369, %v366, -inf
  %374 = vmax.xlane.f32.xlu0 %v373
  %v375 = vpop.xlane.xlu0 %374
  %v376 = vsub.f32 %v274, %v372
  %v377 = vsub.f32 %v366, %v375
  %v378 = vmul.f32 %v376, 1.442695
  %v379 = vpow.pop %v378
  %v380 = vmul.f32 %v377, 1.442695
  %v381 = vpow.pop %v380
  %v382 = vsel %vm369, %v379, 0.0
  %383 = vadd.xlane.f32.xlu0 %v382
  %v384 = vpop.xlane.xlu0 %383
  %v385 = vsel %vm369, %v381, 0.0
  %386 = vadd.xlane.f32.xlu0 %v385
  %v387 = vpop.xlane.xlu0 %386
  %v388 = vrcp.pop %v384
  %v389 = vrcp.pop %v387
  %v390 = vmul.f32 %v379, %v388
  %v391 = vmul.f32 %v381, %v389
  %392 = vrot.lane.b32.xlu0 %v199, 124
  %v393 = vpop.permute.xlu0 %392
  %vm394 = vcmask 48128
  %v396 = vsel %vm394, %v390, 0
  %vm398 = vcmask 1045504
  %v399 = vsel %vm398, %v393, 0
  %401 = vmatprep.subr.mxu0 0.0
  %402 = vmatpush1.msra.mxu0 %v399
  %403 = vmatprep.subr.mxu0 0.0
  %404 = vmatpush1.msra.mxu0 0.0
  %405 = vmatprep.subr.mxu0 0.0
  %406 = vmatpush1.msra.mxu0 0.0
  %407 = vmatprep.subr.mxu0 0.0
  %408 = vmatpush1.msra.mxu0 0.0
  %409 = vmatprep.subr.mxu0 0.0
  %410 = vmatpush1.msra.mxu0 0.0
  %411 = vmatprep.subr.mxu0 0.0
  %412 = vmatpush1.msra.mxu0 0.0
  %413 = vmatprep.subr.mxu0 0.0
  %414 = vmatpush1.msra.mxu0 0.0
  %415 = vmatprep.subr.mxu0 0.0
  %416 = vmatpush1.msra.mxu0 0.0
  %417 = vmatprep.subr.mxu0 0.0
  %418 = vmatpush1.msra.mxu0 0.0
  %419 = vmatprep.subr.mxu0 0.0
  %420 = vmatpush1.msra.mxu0 0.0
  %421 = vmatprep.subr.mxu0 0.0
  %422 = vmatpush1.msra.mxu0 0.0
  %423 = vmatprep.subr.mxu0 0.0
  %424 = vmatpush1.msra.mxu0 0.0
  %425 = vmatprep.subr.mxu0 0.0
  %426 = vmatpush1.msra.mxu0 0.0
  %427 = vmatprep.subr.mxu0 0.0
  %428 = vmatpush1.msra.mxu0 0.0
  %429 = vmatprep.subr.mxu0 0.0
  %430 = vmatpush1.msra.mxu0 0.0
  %431 = vmatprep.subr.mxu0 0.0
  %432 = vmatpush1.msra.mxu0 0.0
  %433 = vmatprep.subr.mxu0 0.0
  %434 = vmatpush1.msra.mxu0 0.0
  %435 = vmatprep.subr.mxu0 0.0
  %436 = vmatpush1.msra.mxu0 0.0
  %437 = vmatprep.subr.mxu0 0.0
  %438 = vmatpush1.msra.mxu0 0.0
  %439 = vmatprep.subr.mxu0 0.0
  %440 = vmatpush1.msra.mxu0 0.0
  %441 = vmatprep.subr.mxu0 0.0
  %442 = vmatpush1.msra.mxu0 0.0
  %443 = vmatprep.subr.mxu0 0.0
  %444 = vmatpush1.msra.mxu0 0.0
  %445 = vmatprep.subr.mxu0 0.0
  %446 = vmatpush1.msra.mxu0 0.0
  %447 = vmatprep.subr.mxu0 0.0
  %448 = vmatpush1.msra.mxu0 0.0
  %449 = vmatprep.subr.mxu0 0.0
  %450 = vmatpush1.msra.mxu0 0.0
  %451 = vmatprep.subr.mxu0 0.0
  %452 = vmatpush1.msra.mxu0 0.0
  %453 = vmatprep.subr.mxu0 0.0
  %454 = vmatpush1.msra.mxu0 0.0
  %455 = vmatprep.subr.mxu0 0.0
  %456 = vmatpush1.msra.mxu0 0.0
  %457 = vmatprep.subr.mxu0 0.0
  %458 = vmatpush1.msra.mxu0 0.0
  %459 = vmatprep.subr.mxu0 0.0
  %460 = vmatpush1.msra.mxu0 0.0
  %461 = vmatprep.subr.mxu0 0.0
  %462 = vmatpush1.msra.mxu0 0.0
  %463 = vmatprep.subr.mxu0 0.0
  %464 = vmatpush1.msra.mxu0 0.0
  %465 = vmatprep.mubr.f32.mxu0 0.0
  %466 = vmatmul.mubr.f32.gmra.mrb[0].mxu0 %v396
  %v467 = vpop.f32.mrb[0].mxu0
  %v468 = vadd.f32 0.0, %v467
  %v469 = vpop.f32.mrb[0].mxu0
  %470 = vdwg.mxu0
  %471 = vrot.lane.b32.xlu0 %v292, 124
  %v472 = vpop.permute.xlu0 %471
  %v474 = vsel %vm394, %v391, 0
  %v476 = vsel %vm398, %v472, 0
  %478 = vmatprep.subr.mxu0 0.0
  %479 = vmatpush1.msra.mxu0 %v476
  %480 = vmatprep.subr.mxu0 0.0
  %481 = vmatpush1.msra.mxu0 0.0
  %482 = vmatprep.subr.mxu0 0.0
  %483 = vmatpush1.msra.mxu0 0.0
  %484 = vmatprep.subr.mxu0 0.0
  %485 = vmatpush1.msra.mxu0 0.0
  %486 = vmatprep.subr.mxu0 0.0
  %487 = vmatpush1.msra.mxu0 0.0
  %488 = vmatprep.subr.mxu0 0.0
  %489 = vmatpush1.msra.mxu0 0.0
  %490 = vmatprep.subr.mxu0 0.0
  %491 = vmatpush1.msra.mxu0 0.0
  %492 = vmatprep.subr.mxu0 0.0
  %493 = vmatpush1.msra.mxu0 0.0
  %494 = vmatprep.subr.mxu0 0.0
  %495 = vmatpush1.msra.mxu0 0.0
  %496 = vmatprep.subr.mxu0 0.0
  %497 = vmatpush1.msra.mxu0 0.0
  %498 = vmatprep.subr.mxu0 0.0
  %499 = vmatpush1.msra.mxu0 0.0
  %500 = vmatprep.subr.mxu0 0.0
  %501 = vmatpush1.msra.mxu0 0.0
  %502 = vmatprep.subr.mxu0 0.0
  %503 = vmatpush1.msra.mxu0 0.0
  %504 = vmatprep.subr.mxu0 0.0
  %505 = vmatpush1.msra.mxu0 0.0
  %506 = vmatprep.subr.mxu0 0.0
  %507 = vmatpush1.msra.mxu0 0.0
  %508 = vmatprep.subr.mxu0 0.0
  %509 = vmatpush1.msra.mxu0 0.0
  %510 = vmatprep.subr.mxu0 0.0
  %511 = vmatpush1.msra.mxu0 0.0
  %512 = vmatprep.subr.mxu0 0.0
  %513 = vmatpush1.msra.mxu0 0.0
  %514 = vmatprep.subr.mxu0 0.0
  %515 = vmatpush1.msra.mxu0 0.0
  %516 = vmatprep.subr.mxu0 0.0
  %517 = vmatpush1.msra.mxu0 0.0
  %518 = vmatprep.subr.mxu0 0.0
  %519 = vmatpush1.msra.mxu0 0.0
  %520 = vmatprep.subr.mxu0 0.0
  %521 = vmatpush1.msra.mxu0 0.0
  %522 = vmatprep.subr.mxu0 0.0
  %523 = vmatpush1.msra.mxu0 0.0
  %524 = vmatprep.subr.mxu0 0.0
  %525 = vmatpush1.msra.mxu0 0.0
  %526 = vmatprep.subr.mxu0 0.0
  %527 = vmatpush1.msra.mxu0 0.0
  %528 = vmatprep.subr.mxu0 0.0
  %529 = vmatpush1.msra.mxu0 0.0
  %530 = vmatprep.subr.mxu0 0.0
  %531 = vmatpush1.msra.mxu0 0.0
  %532 = vmatprep.subr.mxu0 0.0
  %533 = vmatpush1.msra.mxu0 0.0
  %534 = vmatprep.subr.mxu0 0.0
  %535 = vmatpush1.msra.mxu0 0.0
  %536 = vmatprep.subr.mxu0 0.0
  %537 = vmatpush1.msra.mxu0 0.0
  %538 = vmatprep.subr.mxu0 0.0
  %539 = vmatpush1.msra.mxu0 0.0
  %540 = vmatprep.subr.mxu0 0.0
  %541 = vmatpush1.msra.mxu0 0.0
  %542 = vmatprep.mubr.f32.mxu0 0.0
  %543 = vmatmul.mubr.f32.gmra.mrb[0].mxu0 %v474
  %v544 = vpop.f32.mrb[0].mxu0
  %v545 = vadd.f32 0.0, %v544
  %v546 = vpop.f32.mrb[0].mxu0
  %547 = vdwg.mxu0
  %vm548 = vcmask 13312
  %549 = vst.msk [vmem:[%s2] sm:$0x3f] %vm548, %v468
  %550 = vst.msk [vmem:[%s2 + $0x8] sm:$0x3f] %vm548, %v545
  // Predicated region
  $region10: #{tpu_custom_call.1} parent=0 // pred_check
    _
  $region11: #{tpu_custom_call.1} parent=0 // pred_check_branch
    %552 = sbr.rel (0) target = $region13
  $region12: #{tpu_custom_call.1} parent=0 // pred_region
    _
  $region13: #{tpu_custom_call.1} parent=0 // pred_fallthru
    _
  // Predicated region
  $region14: #{tpu_custom_call.1} parent=0 // pred_check
    _
  $region15: #{tpu_custom_call.1} parent=0 // pred_check_branch
    %554 = sbr.rel (0) target = $region17
  $region16: #{tpu_custom_call.1} parent=0 // pred_region
    _
  $region17: #{tpu_custom_call.1} parent=0 // pred_fallthru
    _

</llo_original>
